<compile_context>
chip_gen: v7x
topology: tpu7x:2x2x1
jax: 0.10.0
libtpu: 0.0.40
codegen_flags: <defaults>
</compile_context>

<pallas_src>
import functools
import math

import numpy as np
import jax
import jax.numpy as jnp
from jax.experimental import pallas as pl
from jax.experimental.pallas import tpu as pltpu


def _round_up(x, m):
    return ((x + m - 1) // m) * m


# ---------------------------------------------------------------------------
# Kernel 1: fused token-embedding gather + sqrt(d_model) scale + pos-enc add
# ---------------------------------------------------------------------------
def _embed_posenc_kernel(tok_ids_ref,          # (B*L,) int32, SMEM (scalar prefetch)
                         emb_hbm,              # (V, D) embedding table, HBM
                         pos_ref,              # (L, D) positional table, VMEM (auto)
                         out_ref,              # (1, L, D) output tile, VMEM
                         emb_buf,              # (L, D) VMEM scratch
                         sems,                 # (L,) DMA semaphores
                         *, L, scale):
    base = pl.program_id(0) * L
    # Issue every row-gather DMA first, then wait, so they all overlap.
    # TODO(synk): for production sequence lengths (257 / 1024) chunk this loop
    # (pl.loop) to bound trace-time unrolling and coalesce contiguous runs.
    copies = []
    for t in range(L):
        tok = tok_ids_ref[base + t]
        c = pltpu.make_async_copy(emb_hbm.at[pl.ds(tok, 1)],
                                  emb_buf.at[pl.ds(t, 1)],
                                  sems.at[t])
        c.start()
        copies.append(c)
    for c in copies:
        c.wait()
    out_ref[0] = emb_buf[...] * scale + pos_ref[...]


def embed_and_posenc(token_ids, emb_table, pos_table, scale):
    """out[b, l] = emb_table[token_ids[b, l]] * sqrt(d_model) + pos_table[l]."""
    B, L = token_ids.shape
    V, D = emb_table.shape
    assert pos_table.shape == (L, D)

    tok_ids = jnp.clip(token_ids.reshape(B * L).astype(jnp.int32), 0, V - 1)
    kernel = functools.partial(_embed_posenc_kernel, L=L, scale=float(scale))
    return pl.pallas_call(
        kernel,
        out_shape=jax.ShapeDtypeStruct((B, L, D), emb_table.dtype),
        grid_spec=pltpu.PrefetchScalarGridSpec(
            num_scalar_prefetch=1,                         # token ids -> SMEM
            grid=(B,),                                     # one full row / step
            in_specs=[
                pl.BlockSpec(memory_space=pl.ANY),         # embedding table (HBM)
                pl.BlockSpec((L, D), lambda b, tok: (0, 0)),  # static pos table
            ],
            out_specs=pl.BlockSpec((1, L, D), lambda b, tok: (b, 0, 0)),
            scratch_shapes=[pltpu.VMEM((L, D), emb_table.dtype),
                            pltpu.SemaphoreType.DMA((L,))]),
        compiler_params=pltpu.CompilerParams(
            dimension_semantics=("parallel",)),
    )(tok_ids, emb_table, pos_table)


# ---------------------------------------------------------------------------
# Kernel 2: one fused decoder layer (QKV -> MHA -> out-proj -> add&norm ->
#           FeedForward -> add&norm), gridded over batch blocks.
# ---------------------------------------------------------------------------
# Packed per-layer vector rows inside the (16, D) "vecs" input:
_BQ, _BK, _BV, _BO, _B2, _G1, _BE1, _G2, _BE2 = range(9)
_N_VEC_ROWS = 16   # padded to a sublane multiple


def _layer_norm(x, gamma, beta, eps):
    mu = jnp.mean(x, axis=-1, keepdims=True)
    xc = x - mu
    var = jnp.mean(xc * xc, axis=-1, keepdims=True)
    return gamma * (xc * jax.lax.rsqrt(var + eps)) + beta


def _decoder_layer_kernel(x_ref,               # (Bb, S, D) f32
                          wqkv_ref,            # (D, 3D)  bf16
                          wo_ref,              # (D, D)   bf16
                          w1_ref,              # (D, dff) bf16
                          w2_ref,              # (dff, D) bf16
                          vec_ref,             # (16, D)  f32 packed vectors
                          b1_ref,              # (1, dff) f32
                          o_ref,               # (Bb, S, D) f32
                          *, Bb, S, heads, d_k, eps):
    D = heads * d_k
    M = Bb * S
    x = x_ref[...].reshape(M, D)               # f32 activations (residual path)
    xb = x.astype(jnp.bfloat16)                # bf16 operands for the MXU

    vec = vec_ref[...]
    bq, bk, bv = vec[_BQ:_BQ + 1], vec[_BK:_BK + 1], vec[_BV:_BV + 1]
    bo, b2 = vec[_BO:_BO + 1], vec[_B2:_B2 + 1]
    g1, be1 = vec[_G1:_G1 + 1], vec[_BE1:_BE1 + 1]
    g2, be2 = vec[_G2:_G2 + 1], vec[_BE2:_BE2 + 1]

    # --- fused QKV projection: single (M, D) @ (D, 3D) MXU pass ---
    qkv = jnp.dot(xb, wqkv_ref[...], preferred_element_type=jnp.float32)
    q = (qkv[:, 0:D] + bq).astype(jnp.bfloat16)
    k = (qkv[:, D:2 * D] + bk).astype(jnp.bfloat16)
    v = (qkv[:, 2 * D:3 * D] + bv).astype(jnp.bfloat16)

    # --- multi-head self-attention (no mask; dropout = identity) ---
    # TODO(synk): heads are handled with a static lane-sliced loop (2-D dots)
    # rather than a reshape/transpose + batched dot_general, to stay within
    # Mosaic's safe relayout set; production S needs flash-style K/V tiling
    # so the (S, S) scores never fully materialize.
    inv_sqrt_dk = 1.0 / math.sqrt(d_k)
    batch_outs = []
    for b in range(Bb):
        rs = slice(b * S, (b + 1) * S)
        per_head = []
        for h in range(heads):
            cs = slice(h * d_k, (h + 1) * d_k)
            qh, kh, vh = q[rs, cs], k[rs, cs], v[rs, cs]
            s = jax.lax.dot_general(qh, kh, (((1,), (1,)), ((), ())),
                                    preferred_element_type=jnp.float32)
            s = s * inv_sqrt_dk
            s = s - jnp.max(s, axis=-1, keepdims=True)
            e = jnp.exp(s)
            probs = e * pl.reciprocal(jnp.sum(e, axis=-1, keepdims=True),
                                      approx=True)
            per_head.append(jnp.dot(probs.astype(jnp.bfloat16), vh,
                                    preferred_element_type=jnp.float32))
        batch_outs.append(jnp.concatenate(per_head, axis=-1))   # (S, D)
    attn = batch_outs[0] if Bb == 1 else jnp.concatenate(batch_outs, axis=0)

    attn = jnp.dot(attn.astype(jnp.bfloat16), wo_ref[...],
                   preferred_element_type=jnp.float32) + bo

    # --- residual + norm1 ---
    h1 = _layer_norm(x + attn, g1, be1, eps)

    # --- feed-forward (relu) + residual + norm2 ---
    f = jnp.dot(h1.astype(jnp.bfloat16), w1_ref[...],
                preferred_element_type=jnp.float32) + b1_ref[...]
    f = jnp.maximum(f, 0.0)
    f = jnp.dot(f.astype(jnp.bfloat16), w2_ref[...],
                preferred_element_type=jnp.float32) + b2
    out = _layer_norm(h1 + f, g2, be2, eps)

    o_ref[...] = out.reshape(Bb, S, D).astype(o_ref.dtype)


def _pick_batch_block(B, S):
    # Prefer a large MXU M dimension (Bb*S rows); at production S (>=128) this
    # leaves Bb=1 so the batch grid axis still feeds both v7x TensorCores.
    if S >= 128:
        return 1
    bb = 1
    for cand in range(1, B + 1):
        if B % cand == 0 and cand * S <= 128:
            bb = cand
    return bb


def decoder_layer(x, p, *, heads, eps=1e-6):
    B, S, D = x.shape
    d_ff = p['w1'].shape[1]
    Bb = _pick_batch_block(B, S)
    nb = B // Bb

    # Pack weights (bf16 MXU operands) and the 9 per-layer (1, D) vectors.
    wqkv = jnp.concatenate([p['wq'], p['wk'], p['wv']], axis=1).astype(jnp.bfloat16)
    wo = p['wo'].astype(jnp.bfloat16)
    w1 = p['w1'].astype(jnp.bfloat16)
    w2 = p['w2'].astype(jnp.bfloat16)
    packed = jnp.concatenate([p['bq'], p['bk'], p['bv'], p['bo'], p['b2'],
                              p['g1'], p['be1'], p['g2'], p['be2']], axis=0)
    vecs = jnp.zeros((_N_VEC_ROWS, D), jnp.float32).at[:9].set(packed)
    b1 = p['b1']

    kernel = functools.partial(_decoder_layer_kernel, Bb=Bb, S=S,
                               heads=heads, d_k=D // heads, eps=eps)

    def w_spec(shape):
        # TODO(synk): at production shapes add pipeline_mode=pl.Buffered(1) and
        # an explicit vmem_limit_bytes so constant weights are not double-buffered.
        return pl.BlockSpec(shape, lambda i: (0, 0))

    in_specs = [
        pl.BlockSpec((Bb, S, D), lambda i: (i, 0, 0)),   # activations
        w_spec((D, 3 * D)),                              # wqkv
        w_spec((D, D)),                                  # wo
        w_spec((D, d_ff)),                               # w1
        w_spec((d_ff, D)),                               # w2
        w_spec((_N_VEC_ROWS, D)),                        # packed bias/LN vectors
        w_spec((1, d_ff)),                               # b1
    ]
    return pl.pallas_call(
        kernel,
        out_shape=jax.ShapeDtypeStruct((B, S, D), x.dtype),
        grid=(nb,),
        in_specs=in_specs,
        out_specs=pl.BlockSpec((Bb, S, D), lambda i: (i, 0, 0)),
        compiler_params=pltpu.CompilerParams(
            dimension_semantics=("parallel",)),
    )(x, wqkv, wo, w1, w2, vecs, b1)


# ---------------------------------------------------------------------------
# Kernel 3: tiled final_fc logits projection (lane-dense output tiles)
# ---------------------------------------------------------------------------
def _linear_kernel(x_ref, w_ref, b_ref, o_ref):
    acc = jnp.dot(x_ref[...], w_ref[...], preferred_element_type=jnp.float32)
    o_ref[...] = (acc + b_ref[...]).astype(o_ref.dtype)


def linear(x2d, w, b):
    M, D = x2d.shape
    N = w.shape[1]
    Np = _round_up(N, 128)                     # lane-dense (unmasked vst) output
    tm = 128 if M >= 128 else _round_up(M, 8)
    Mp = _round_up(M, tm)
    tn = next(t for t in (512, 256, 128) if Np % t == 0)

    x_p = jnp.pad(x2d, ((0, Mp - M), (0, 0))).astype(jnp.bfloat16)
    w_p = jnp.pad(w, ((0, 0), (0, Np - N))).astype(jnp.bfloat16)
    b_p = jnp.pad(b, ((0, 0), (0, Np - N)))

    out = pl.pallas_call(
        _linear_kernel,
        out_shape=jax.ShapeDtypeStruct((Mp, Np), jnp.float32),
        grid=(Mp // tm, Np // tn),
        in_specs=[pl.BlockSpec((tm, D), lambda i, j: (i, 0)),
                  pl.BlockSpec((D, tn), lambda i, j: (0, j)),
                  pl.BlockSpec((1, tn), lambda i, j: (0, j))],
        out_specs=pl.BlockSpec((tm, tn), lambda i, j: (i, j)),
        compiler_params=pltpu.CompilerParams(
            dimension_semantics=("parallel", "parallel")),
    )(x_p, w_p, b_p)
    return out[:M, :N]


# ---------------------------------------------------------------------------
# Full model forward
# ---------------------------------------------------------------------------
def decoder_only_transformer(text_tokens, image_tokens, params, *, heads):
    d_model = params['text_emb'].shape[1]
    scale = math.sqrt(d_model)

    text_stream = embed_and_posenc(text_tokens, params['text_emb'],
                                   params['text_pos'], scale)
    image_stream = embed_and_posenc(image_tokens, params['image_emb'],
                                    params['image_pos'], scale)

    stream = jnp.concatenate([text_stream, image_stream], axis=1)
    if stream.shape[1] > params['len_stream']:
        stream = stream[:, :-1, :]

    x = stream
    for layer_params in params['layers']:
        x = decoder_layer(x, layer_params, heads=heads)

    B, S, D = x.shape
    logits = linear(x.reshape(B * S, D), params['wf'], params['bf'])
    return logits.reshape(B, S, -1)


# ---------------------------------------------------------------------------
# Parameter construction + pure-JAX reference (for correctness check)
# ---------------------------------------------------------------------------
def _sinusoid_table(seq_len, d_model):
    pos = np.arange(seq_len)[:, None].astype(np.float64)
    i = np.arange(0, d_model, 2)[None, :].astype(np.float64)
    angle = pos / np.power(10000.0, i / d_model)
    pe = np.zeros((seq_len, d_model), np.float32)
    pe[:, 0::2] = np.sin(angle)
    pe[:, 1::2] = np.cos(angle)
    return jnp.asarray(pe)


def init_params(key, *, text_vocab, text_seq_len, image_vocab, image_seq_len,
                d_model, n_layers, d_ff):
    keys = iter(jax.random.split(key, 64))

    def rnd(shape, s=0.05):
        return jax.random.normal(next(keys), shape, jnp.float32) * s

    layers = []
    for _ in range(n_layers):
        layers.append(dict(
            wq=rnd((d_model, d_model)), bq=rnd((1, d_model)),
            wk=rnd((d_model, d_model)), bk=rnd((1, d_model)),
            wv=rnd((d_model, d_model)), bv=rnd((1, d_model)),
            wo=rnd((d_model, d_model)), bo=rnd((1, d_model)),
            g1=jnp.ones((1, d_model), jnp.float32),
            be1=jnp.zeros((1, d_model), jnp.float32),
            w1=rnd((d_model, d_ff)), b1=rnd((1, d_ff)),
            w2=rnd((d_ff, d_model)), b2=rnd((1, d_model)),
            g2=jnp.ones((1, d_model), jnp.float32),
            be2=jnp.zeros((1, d_model), jnp.float32),
        ))
    n_out = text_vocab + text_seq_len + image_vocab
    return dict(
        text_emb=rnd((text_vocab + text_seq_len, d_model), 0.1),
        image_emb=rnd((image_vocab, d_model), 0.1),
        text_pos=_sinusoid_table(text_seq_len + 1, d_model),
        image_pos=_sinusoid_table(image_seq_len, d_model),
        layers=layers,
        wf=rnd((d_model, n_out)), bf=rnd((1, n_out)),
        len_stream=text_seq_len + image_seq_len,
    )


def ref_forward(text_tokens, image_tokens, params, *, heads, eps=1e-6):
    hp = jax.lax.Precision.HIGHEST
    D = params['text_emb'].shape[1]
    scale = math.sqrt(D)

    def embed(ids, table, pos):
        e = jnp.take(table, ids, axis=0) * scale
        return e + pos[None, :ids.shape[1], :]

    def layer_norm(x, g, b):
        mu = x.mean(-1, keepdims=True)
        var = ((x - mu) ** 2).mean(-1, keepdims=True)
        return g * (x - mu) / jnp.sqrt(var + eps) + b

    x = jnp.concatenate(
        [embed(text_tokens, params['text_emb'], params['text_pos']),
         embed(image_tokens, params['image_emb'], params['image_pos'])], axis=1)
    if x.shape[1] > params['len_stream']:
        x = x[:, :-1, :]

    for lp in params['layers']:
        B, S, Dm = x.shape
        dk = Dm // heads
        q = jnp.einsum('bsd,de->bse', x, lp['wq'], precision=hp) + lp['bq']
        k = jnp.einsum('bsd,de->bse', x, lp['wk'], precision=hp) + lp['bk']
        v = jnp.einsum('bsd,de->bse', x, lp['wv'], precision=hp) + lp['bv']
        qh = q.reshape(B, S, heads, dk).transpose(0, 2, 1, 3)
        kh = k.reshape(B, S, heads, dk).transpose(0, 2, 1, 3)
        vh = v.reshape(B, S, heads, dk).transpose(0, 2, 1, 3)
        sc = jnp.einsum('bhqd,bhkd->bhqk', qh, kh, precision=hp) / math.sqrt(dk)
        p = jax.nn.softmax(sc, axis=-1)
        o = jnp.einsum('bhqk,bhkd->bhqd', p, vh, precision=hp)
        o = o.transpose(0, 2, 1, 3).reshape(B, S, Dm)
        o = jnp.einsum('bsd,de->bse', o, lp['wo'], precision=hp) + lp['bo']
        x1 = layer_norm(x + o, lp['g1'], lp['be1'])
        f = jnp.maximum(
            jnp.einsum('bsd,df->bsf', x1, lp['w1'], precision=hp) + lp['b1'], 0.0)
        f = jnp.einsum('bsf,fd->bsd', f, lp['w2'], precision=hp) + lp['b2']
        x = layer_norm(x1 + f, lp['g2'], lp['be2'])

    return jnp.einsum('bsd,dv->bsv', x, params['wf'], precision=hp) + params['bf']


# ---------------------------------------------------------------------------
if __name__ == "__main__":
    # Small shapes consistent with the module (paper: 16384/256/8192/1024/512).
    text_vocab = 32
    text_seq_len = 8
    image_vocab = 24
    image_seq_len = 8
    d_model = 128          # multiple of 128 -> lane-dense tiles
    n_layers = 2
    heads = 4
    d_ff = 256
    B = 2

    key = jax.random.PRNGKey(0)
    k_params, k_text, k_image = jax.random.split(key, 3)

    params = init_params(k_params, text_vocab=text_vocab,
                         text_seq_len=text_seq_len, image_vocab=image_vocab,
                         image_seq_len=image_seq_len, d_model=d_model,
                         n_layers=n_layers, d_ff=d_ff)

    # Text tokens: <bos>=0 at position 0, rest in [0, text_vocab + text_seq_len).
    text_tokens = jax.random.randint(
        k_text, (B, text_seq_len + 1), 0, text_vocab + text_seq_len,
        dtype=jnp.int32).at[:, 0].set(0)
    image_tokens = jax.random.randint(
        k_image, (B, image_seq_len), 0, image_vocab, dtype=jnp.int32)

    out = decoder_only_transformer(text_tokens, image_tokens, params, heads=heads)
    out = jax.block_until_ready(out)

    ref = ref_forward(text_tokens, image_tokens, params, heads=heads)
    expected_shape = (B, text_seq_len + image_seq_len,
                      text_vocab + text_seq_len + image_vocab)
    assert out.shape == expected_shape, (out.shape, expected_shape)
    assert out.dtype == jnp.float32
    # bf16 MXU operands with f32 accumulation vs. an f32 HIGHEST-precision ref.
    max_err = float(jnp.max(jnp.abs(out - ref)))
    assert max_err < 3e-2, f"max abs err {max_err}"

    # TODO(synk): nn.Dropout layers are identity here (inference/eval forward).
    print("KERNEL_OK")
</pallas_src>

<mosaic_0001>
module attributes {stable_mosaic.version = 11 : i64} {
  func.func @_embed_posenc_kernel(%arg0: i32, %arg1: memref<18xi32, #tpu.memory_space<smem>>, %arg2: memref<40x128xf32, #tpu.memory_space<any>>, %arg3: memref<9x128xf32, #tpu.memory_space<vmem>>, %arg4: memref<1x9x128xf32, #tpu.memory_space<vmem>>, %arg5: memref<9x128xf32, #tpu.memory_space<vmem>>, %arg6: memref<9x!tpu.dma_semaphore, #tpu.memory_space<semaphore_mem>>) attributes {dimension_semantics = [#tpu.dimension_semantics<parallel>], iteration_bounds = array<i64: 2>, scalar_prefetch = 1 : i64, scratch_operands = 2 : i64, tpu.core_type = #tpu.core_type<tc>, window_params = [{}, {pipeline_mode = #tpu.pipeline_mode<synchronous>, transform_indices = @transform_1, window_bounds = array<i64: 9, 128>}, {transform_indices = @transform_2, window_bounds = array<i64: 1, 9, 128>}]} {
    %c9_i32 = arith.constant 9 : i32
    %0 = arith.muli %arg0, %c9_i32 : i32
    %c0_i32 = arith.constant 0 : i32
    %1 = arith.addi %0, %c0_i32 : i32
    %2 = arith.index_cast %1 : i32 to index
    %3 = memref.load %arg1[%2] : memref<18xi32, #tpu.memory_space<smem>>
    %c0_i32_0 = arith.constant 0 : i32
    %c0_i32_1 = arith.constant 0 : i32
    %4 = tpu.memref_slice %arg2[%3, %c0_i32_1] : memref<40x128xf32, #tpu.memory_space<any>> -> memref<1x128xf32, #tpu.memory_space<any>>
    %c0_i32_2 = arith.constant 0 : i32
    %c0_i32_3 = arith.constant 0 : i32
    %5 = tpu.memref_slice %arg5[%c0_i32_2, %c0_i32_3] : memref<9x128xf32, #tpu.memory_space<vmem>> -> memref<1x128xf32, #tpu.memory_space<vmem>>
    %6 = tpu.memref_slice %arg6[%c0_i32_0] : memref<9x!tpu.dma_semaphore, #tpu.memory_space<semaphore_mem>> -> memref<1x!tpu.dma_semaphore, #tpu.memory_space<semaphore_mem>>
    %7 = tpu.memref_squeeze %6 : memref<1x!tpu.dma_semaphore, #tpu.memory_space<semaphore_mem>> -> memref<!tpu.dma_semaphore, #tpu.memory_space<semaphore_mem>>
    tpu.enqueue_dma source(%4 : memref<1x128xf32, #tpu.memory_space<any>>) target(%5 : memref<1x128xf32, #tpu.memory_space<vmem>>) target_semaphore(%7 : memref<!tpu.dma_semaphore, #tpu.memory_space<semaphore_mem>>)
    %c1_i32 = arith.constant 1 : i32
    %8 = arith.addi %0, %c1_i32 : i32
    %9 = arith.index_cast %8 : i32 to index
    %10 = memref.load %arg1[%9] : memref<18xi32, #tpu.memory_space<smem>>
    %c1_i32_4 = arith.constant 1 : i32
    %c0_i32_5 = arith.constant 0 : i32
    %11 = tpu.memref_slice %arg2[%10, %c0_i32_5] : memref<40x128xf32, #tpu.memory_space<any>> -> memref<1x128xf32, #tpu.memory_space<any>>
    %c1_i32_6 = arith.constant 1 : i32
    %c0_i32_7 = arith.constant 0 : i32
    %12 = tpu.memref_slice %arg5[%c1_i32_6, %c0_i32_7] : memref<9x128xf32, #tpu.memory_space<vmem>> -> memref<1x128xf32, #tpu.memory_space<vmem>>
    %13 = tpu.memref_slice %arg6[%c1_i32_4] : memref<9x!tpu.dma_semaphore, #tpu.memory_space<semaphore_mem>> -> memref<1x!tpu.dma_semaphore, #tpu.memory_space<semaphore_mem>>
    %14 = tpu.memref_squeeze %13 : memref<1x!tpu.dma_semaphore, #tpu.memory_space<semaphore_mem>> -> memref<!tpu.dma_semaphore, #tpu.memory_space<semaphore_mem>>
    tpu.enqueue_dma source(%11 : memref<1x128xf32, #tpu.memory_space<any>>) target(%12 : memref<1x128xf32, #tpu.memory_space<vmem>>) target_semaphore(%14 : memref<!tpu.dma_semaphore, #tpu.memory_space<semaphore_mem>>)
    %c2_i32 = arith.constant 2 : i32
    %15 = arith.addi %0, %c2_i32 : i32
    %16 = arith.index_cast %15 : i32 to index
    %17 = memref.load %arg1[%16] : memref<18xi32, #tpu.memory_space<smem>>
    %c2_i32_8 = arith.constant 2 : i32
    %c0_i32_9 = arith.constant 0 : i32
    %18 = tpu.memref_slice %arg2[%17, %c0_i32_9] : memref<40x128xf32, #tpu.memory_space<any>> -> memref<1x128xf32, #tpu.memory_space<any>>
    %c2_i32_10 = arith.constant 2 : i32
    %c0_i32_11 = arith.constant 0 : i32
    %19 = tpu.memref_slice %arg5[%c2_i32_10, %c0_i32_11] : memref<9x128xf32, #tpu.memory_space<vmem>> -> memref<1x128xf32, #tpu.memory_space<vmem>>
    %20 = tpu.memref_slice %arg6[%c2_i32_8] : memref<9x!tpu.dma_semaphore, #tpu.memory_space<semaphore_mem>> -> memref<1x!tpu.dma_semaphore, #tpu.memory_space<semaphore_mem>>
    %21 = tpu.memref_squeeze %20 : memref<1x!tpu.dma_semaphore, #tpu.memory_space<semaphore_mem>> -> memref<!tpu.dma_semaphore, #tpu.memory_space<semaphore_mem>>
    tpu.enqueue_dma source(%18 : memref<1x128xf32, #tpu.memory_space<any>>) target(%19 : memref<1x128xf32, #tpu.memory_space<vmem>>) target_semaphore(%21 : memref<!tpu.dma_semaphore, #tpu.memory_space<semaphore_mem>>)
    %c3_i32 = arith.constant 3 : i32
    %22 = arith.addi %0, %c3_i32 : i32
    %23 = arith.index_cast %22 : i32 to index
    %24 = memref.load %arg1[%23] : memref<18xi32, #tpu.memory_space<smem>>
    %c3_i32_12 = arith.constant 3 : i32
    %c0_i32_13 = arith.constant 0 : i32
    %25 = tpu.memref_slice %arg2[%24, %c0_i32_13] : memref<40x128xf32, #tpu.memory_space<any>> -> memref<1x128xf32, #tpu.memory_space<any>>
    %c3_i32_14 = arith.constant 3 : i32
    %c0_i32_15 = arith.constant 0 : i32
    %26 = tpu.memref_slice %arg5[%c3_i32_14, %c0_i32_15] : memref<9x128xf32, #tpu.memory_space<vmem>> -> memref<1x128xf32, #tpu.memory_space<vmem>>
    %27 = tpu.memref_slice %arg6[%c3_i32_12] : memref<9x!tpu.dma_semaphore, #tpu.memory_space<semaphore_mem>> -> memref<1x!tpu.dma_semaphore, #tpu.memory_space<semaphore_mem>>
    %28 = tpu.memref_squeeze %27 : memref<1x!tpu.dma_semaphore, #tpu.memory_space<semaphore_mem>> -> memref<!tpu.dma_semaphore, #tpu.memory_space<semaphore_mem>>
    tpu.enqueue_dma source(%25 : memref<1x128xf32, #tpu.memory_space<any>>) target(%26 : memref<1x128xf32, #tpu.memory_space<vmem>>) target_semaphore(%28 : memref<!tpu.dma_semaphore, #tpu.memory_space<semaphore_mem>>)
    %c4_i32 = arith.constant 4 : i32
    %29 = arith.addi %0, %c4_i32 : i32
    %30 = arith.index_cast %29 : i32 to index
    %31 = memref.load %arg1[%30] : memref<18xi32, #tpu.memory_space<smem>>
    %c4_i32_16 = arith.constant 4 : i32
    %c0_i32_17 = arith.constant 0 : i32
    %32 = tpu.memref_slice %arg2[%31, %c0_i32_17] : memref<40x128xf32, #tpu.memory_space<any>> -> memref<1x128xf32, #tpu.memory_space<any>>
    %c4_i32_18 = arith.constant 4 : i32
    %c0_i32_19 = arith.constant 0 : i32
    %33 = tpu.memref_slice %arg5[%c4_i32_18, %c0_i32_19] : memref<9x128xf32, #tpu.memory_space<vmem>> -> memref<1x128xf32, #tpu.memory_space<vmem>>
    %34 = tpu.memref_slice %arg6[%c4_i32_16] : memref<9x!tpu.dma_semaphore, #tpu.memory_space<semaphore_mem>> -> memref<1x!tpu.dma_semaphore, #tpu.memory_space<semaphore_mem>>
    %35 = tpu.memref_squeeze %34 : memref<1x!tpu.dma_semaphore, #tpu.memory_space<semaphore_mem>> -> memref<!tpu.dma_semaphore, #tpu.memory_space<semaphore_mem>>
    tpu.enqueue_dma source(%32 : memref<1x128xf32, #tpu.memory_space<any>>) target(%33 : memref<1x128xf32, #tpu.memory_space<vmem>>) target_semaphore(%35 : memref<!tpu.dma_semaphore, #tpu.memory_space<semaphore_mem>>)
    %c5_i32 = arith.constant 5 : i32
    %36 = arith.addi %0, %c5_i32 : i32
    %37 = arith.index_cast %36 : i32 to index
    %38 = memref.load %arg1[%37] : memref<18xi32, #tpu.memory_space<smem>>
    %c5_i32_20 = arith.constant 5 : i32
    %c0_i32_21 = arith.constant 0 : i32
    %39 = tpu.memref_slice %arg2[%38, %c0_i32_21] : memref<40x128xf32, #tpu.memory_space<any>> -> memref<1x128xf32, #tpu.memory_space<any>>
    %c5_i32_22 = arith.constant 5 : i32
    %c0_i32_23 = arith.constant 0 : i32
    %40 = tpu.memref_slice %arg5[%c5_i32_22, %c0_i32_23] : memref<9x128xf32, #tpu.memory_space<vmem>> -> memref<1x128xf32, #tpu.memory_space<vmem>>
    %41 = tpu.memref_slice %arg6[%c5_i32_20] : memref<9x!tpu.dma_semaphore, #tpu.memory_space<semaphore_mem>> -> memref<1x!tpu.dma_semaphore, #tpu.memory_space<semaphore_mem>>
    %42 = tpu.memref_squeeze %41 : memref<1x!tpu.dma_semaphore, #tpu.memory_space<semaphore_mem>> -> memref<!tpu.dma_semaphore, #tpu.memory_space<semaphore_mem>>
    tpu.enqueue_dma source(%39 : memref<1x128xf32, #tpu.memory_space<any>>) target(%40 : memref<1x128xf32, #tpu.memory_space<vmem>>) target_semaphore(%42 : memref<!tpu.dma_semaphore, #tpu.memory_space<semaphore_mem>>)
    %c6_i32 = arith.constant 6 : i32
    %43 = arith.addi %0, %c6_i32 : i32
    %44 = arith.index_cast %43 : i32 to index
    %45 = memref.load %arg1[%44] : memref<18xi32, #tpu.memory_space<smem>>
    %c6_i32_24 = arith.constant 6 : i32
    %c0_i32_25 = arith.constant 0 : i32
    %46 = tpu.memref_slice %arg2[%45, %c0_i32_25] : memref<40x128xf32, #tpu.memory_space<any>> -> memref<1x128xf32, #tpu.memory_space<any>>
    %c6_i32_26 = arith.constant 6 : i32
    %c0_i32_27 = arith.constant 0 : i32
    %47 = tpu.memref_slice %arg5[%c6_i32_26, %c0_i32_27] : memref<9x128xf32, #tpu.memory_space<vmem>> -> memref<1x128xf32, #tpu.memory_space<vmem>>
    %48 = tpu.memref_slice %arg6[%c6_i32_24] : memref<9x!tpu.dma_semaphore, #tpu.memory_space<semaphore_mem>> -> memref<1x!tpu.dma_semaphore, #tpu.memory_space<semaphore_mem>>
    %49 = tpu.memref_squeeze %48 : memref<1x!tpu.dma_semaphore, #tpu.memory_space<semaphore_mem>> -> memref<!tpu.dma_semaphore, #tpu.memory_space<semaphore_mem>>
    tpu.enqueue_dma source(%46 : memref<1x128xf32, #tpu.memory_space<any>>) target(%47 : memref<1x128xf32, #tpu.memory_space<vmem>>) target_semaphore(%49 : memref<!tpu.dma_semaphore, #tpu.memory_space<semaphore_mem>>)
    %c7_i32 = arith.constant 7 : i32
    %50 = arith.addi %0, %c7_i32 : i32
    %51 = arith.index_cast %50 : i32 to index
    %52 = memref.load %arg1[%51] : memref<18xi32, #tpu.memory_space<smem>>
    %c7_i32_28 = arith.constant 7 : i32
    %c0_i32_29 = arith.constant 0 : i32
    %53 = tpu.memref_slice %arg2[%52, %c0_i32_29] : memref<40x128xf32, #tpu.memory_space<any>> -> memref<1x128xf32, #tpu.memory_space<any>>
    %c7_i32_30 = arith.constant 7 : i32
    %c0_i32_31 = arith.constant 0 : i32
    %54 = tpu.memref_slice %arg5[%c7_i32_30, %c0_i32_31] : memref<9x128xf32, #tpu.memory_space<vmem>> -> memref<1x128xf32, #tpu.memory_space<vmem>>
    %55 = tpu.memref_slice %arg6[%c7_i32_28] : memref<9x!tpu.dma_semaphore, #tpu.memory_space<semaphore_mem>> -> memref<1x!tpu.dma_semaphore, #tpu.memory_space<semaphore_mem>>
    %56 = tpu.memref_squeeze %55 : memref<1x!tpu.dma_semaphore, #tpu.memory_space<semaphore_mem>> -> memref<!tpu.dma_semaphore, #tpu.memory_space<semaphore_mem>>
    tpu.enqueue_dma source(%53 : memref<1x128xf32, #tpu.memory_space<any>>) target(%54 : memref<1x128xf32, #tpu.memory_space<vmem>>) target_semaphore(%56 : memref<!tpu.dma_semaphore, #tpu.memory_space<semaphore_mem>>)
    %c8_i32 = arith.constant 8 : i32
    %57 = arith.addi %0, %c8_i32 : i32
    %58 = arith.index_cast %57 : i32 to index
    %59 = memref.load %arg1[%58] : memref<18xi32, #tpu.memory_space<smem>>
    %c8_i32_32 = arith.constant 8 : i32
    %c0_i32_33 = arith.constant 0 : i32
    %60 = tpu.memref_slice %arg2[%59, %c0_i32_33] : memref<40x128xf32, #tpu.memory_space<any>> -> memref<1x128xf32, #tpu.memory_space<any>>
    %c8_i32_34 = arith.constant 8 : i32
    %c0_i32_35 = arith.constant 0 : i32
    %61 = tpu.memref_slice %arg5[%c8_i32_34, %c0_i32_35] : memref<9x128xf32, #tpu.memory_space<vmem>> -> memref<1x128xf32, #tpu.memory_space<vmem>>
    %62 = tpu.memref_slice %arg6[%c8_i32_32] : memref<9x!tpu.dma_semaphore, #tpu.memory_space<semaphore_mem>> -> memref<1x!tpu.dma_semaphore, #tpu.memory_space<semaphore_mem>>
    %63 = tpu.memref_squeeze %62 : memref<1x!tpu.dma_semaphore, #tpu.memory_space<semaphore_mem>> -> memref<!tpu.dma_semaphore, #tpu.memory_space<semaphore_mem>>
    tpu.enqueue_dma source(%60 : memref<1x128xf32, #tpu.memory_space<any>>) target(%61 : memref<1x128xf32, #tpu.memory_space<vmem>>) target_semaphore(%63 : memref<!tpu.dma_semaphore, #tpu.memory_space<semaphore_mem>>)
    %c0_i32_36 = arith.constant 0 : i32
    %c0_i32_37 = arith.constant 0 : i32
    %64 = tpu.memref_slice %arg2[%3, %c0_i32_37] : memref<40x128xf32, #tpu.memory_space<any>> -> memref<1x128xf32, #tpu.memory_space<any>>
    %c0_i32_38 = arith.constant 0 : i32
    %c0_i32_39 = arith.constant 0 : i32
    %65 = tpu.memref_slice %arg5[%c0_i32_38, %c0_i32_39] : memref<9x128xf32, #tpu.memory_space<vmem>> -> memref<1x128xf32, #tpu.memory_space<vmem>>
    %66 = tpu.memref_slice %arg6[%c0_i32_36] : memref<9x!tpu.dma_semaphore, #tpu.memory_space<semaphore_mem>> -> memref<1x!tpu.dma_semaphore, #tpu.memory_space<semaphore_mem>>
    %67 = tpu.memref_squeeze %66 : memref<1x!tpu.dma_semaphore, #tpu.memory_space<semaphore_mem>> -> memref<!tpu.dma_semaphore, #tpu.memory_space<semaphore_mem>>
    tpu.wait_dma2 semaphore(%67 : memref<!tpu.dma_semaphore, #tpu.memory_space<semaphore_mem>>) src(%64 : memref<1x128xf32, #tpu.memory_space<any>>) dst(%65 : memref<1x128xf32, #tpu.memory_space<vmem>>)
    %c1_i32_40 = arith.constant 1 : i32
    %c0_i32_41 = arith.constant 0 : i32
    %68 = tpu.memref_slice %arg2[%10, %c0_i32_41] : memref<40x128xf32, #tpu.memory_space<any>> -> memref<1x128xf32, #tpu.memory_space<any>>
    %c1_i32_42 = arith.constant 1 : i32
    %c0_i32_43 = arith.constant 0 : i32
    %69 = tpu.memref_slice %arg5[%c1_i32_42, %c0_i32_43] : memref<9x128xf32, #tpu.memory_space<vmem>> -> memref<1x128xf32, #tpu.memory_space<vmem>>
    %70 = tpu.memref_slice %arg6[%c1_i32_40] : memref<9x!tpu.dma_semaphore, #tpu.memory_space<semaphore_mem>> -> memref<1x!tpu.dma_semaphore, #tpu.memory_space<semaphore_mem>>
    %71 = tpu.memref_squeeze %70 : memref<1x!tpu.dma_semaphore, #tpu.memory_space<semaphore_mem>> -> memref<!tpu.dma_semaphore, #tpu.memory_space<semaphore_mem>>
    tpu.wait_dma2 semaphore(%71 : memref<!tpu.dma_semaphore, #tpu.memory_space<semaphore_mem>>) src(%68 : memref<1x128xf32, #tpu.memory_space<any>>) dst(%69 : memref<1x128xf32, #tpu.memory_space<vmem>>)
    %c2_i32_44 = arith.constant 2 : i32
    %c0_i32_45 = arith.constant 0 : i32
    %72 = tpu.memref_slice %arg2[%17, %c0_i32_45] : memref<40x128xf32, #tpu.memory_space<any>> -> memref<1x128xf32, #tpu.memory_space<any>>
    %c2_i32_46 = arith.constant 2 : i32
    %c0_i32_47 = arith.constant 0 : i32
    %73 = tpu.memref_slice %arg5[%c2_i32_46, %c0_i32_47] : memref<9x128xf32, #tpu.memory_space<vmem>> -> memref<1x128xf32, #tpu.memory_space<vmem>>
    %74 = tpu.memref_slice %arg6[%c2_i32_44] : memref<9x!tpu.dma_semaphore, #tpu.memory_space<semaphore_mem>> -> memref<1x!tpu.dma_semaphore, #tpu.memory_space<semaphore_mem>>
    %75 = tpu.memref_squeeze %74 : memref<1x!tpu.dma_semaphore, #tpu.memory_space<semaphore_mem>> -> memref<!tpu.dma_semaphore, #tpu.memory_space<semaphore_mem>>
    tpu.wait_dma2 semaphore(%75 : memref<!tpu.dma_semaphore, #tpu.memory_space<semaphore_mem>>) src(%72 : memref<1x128xf32, #tpu.memory_space<any>>) dst(%73 : memref<1x128xf32, #tpu.memory_space<vmem>>)
    %c3_i32_48 = arith.constant 3 : i32
    %c0_i32_49 = arith.constant 0 : i32
    %76 = tpu.memref_slice %arg2[%24, %c0_i32_49] : memref<40x128xf32, #tpu.memory_space<any>> -> memref<1x128xf32, #tpu.memory_space<any>>
    %c3_i32_50 = arith.constant 3 : i32
    %c0_i32_51 = arith.constant 0 : i32
    %77 = tpu.memref_slice %arg5[%c3_i32_50, %c0_i32_51] : memref<9x128xf32, #tpu.memory_space<vmem>> -> memref<1x128xf32, #tpu.memory_space<vmem>>
    %78 = tpu.memref_slice %arg6[%c3_i32_48] : memref<9x!tpu.dma_semaphore, #tpu.memory_space<semaphore_mem>> -> memref<1x!tpu.dma_semaphore, #tpu.memory_space<semaphore_mem>>
    %79 = tpu.memref_squeeze %78 : memref<1x!tpu.dma_semaphore, #tpu.memory_space<semaphore_mem>> -> memref<!tpu.dma_semaphore, #tpu.memory_space<semaphore_mem>>
    tpu.wait_dma2 semaphore(%79 : memref<!tpu.dma_semaphore, #tpu.memory_space<semaphore_mem>>) src(%76 : memref<1x128xf32, #tpu.memory_space<any>>) dst(%77 : memref<1x128xf32, #tpu.memory_space<vmem>>)
    %c4_i32_52 = arith.constant 4 : i32
    %c0_i32_53 = arith.constant 0 : i32
    %80 = tpu.memref_slice %arg2[%31, %c0_i32_53] : memref<40x128xf32, #tpu.memory_space<any>> -> memref<1x128xf32, #tpu.memory_space<any>>
    %c4_i32_54 = arith.constant 4 : i32
    %c0_i32_55 = arith.constant 0 : i32
    %81 = tpu.memref_slice %arg5[%c4_i32_54, %c0_i32_55] : memref<9x128xf32, #tpu.memory_space<vmem>> -> memref<1x128xf32, #tpu.memory_space<vmem>>
    %82 = tpu.memref_slice %arg6[%c4_i32_52] : memref<9x!tpu.dma_semaphore, #tpu.memory_space<semaphore_mem>> -> memref<1x!tpu.dma_semaphore, #tpu.memory_space<semaphore_mem>>
    %83 = tpu.memref_squeeze %82 : memref<1x!tpu.dma_semaphore, #tpu.memory_space<semaphore_mem>> -> memref<!tpu.dma_semaphore, #tpu.memory_space<semaphore_mem>>
    tpu.wait_dma2 semaphore(%83 : memref<!tpu.dma_semaphore, #tpu.memory_space<semaphore_mem>>) src(%80 : memref<1x128xf32, #tpu.memory_space<any>>) dst(%81 : memref<1x128xf32, #tpu.memory_space<vmem>>)
    %c5_i32_56 = arith.constant 5 : i32
    %c0_i32_57 = arith.constant 0 : i32
    %84 = tpu.memref_slice %arg2[%38, %c0_i32_57] : memref<40x128xf32, #tpu.memory_space<any>> -> memref<1x128xf32, #tpu.memory_space<any>>
    %c5_i32_58 = arith.constant 5 : i32
    %c0_i32_59 = arith.constant 0 : i32
    %85 = tpu.memref_slice %arg5[%c5_i32_58, %c0_i32_59] : memref<9x128xf32, #tpu.memory_space<vmem>> -> memref<1x128xf32, #tpu.memory_space<vmem>>
    %86 = tpu.memref_slice %arg6[%c5_i32_56] : memref<9x!tpu.dma_semaphore, #tpu.memory_space<semaphore_mem>> -> memref<1x!tpu.dma_semaphore, #tpu.memory_space<semaphore_mem>>
    %87 = tpu.memref_squeeze %86 : memref<1x!tpu.dma_semaphore, #tpu.memory_space<semaphore_mem>> -> memref<!tpu.dma_semaphore, #tpu.memory_space<semaphore_mem>>
    tpu.wait_dma2 semaphore(%87 : memref<!tpu.dma_semaphore, #tpu.memory_space<semaphore_mem>>) src(%84 : memref<1x128xf32, #tpu.memory_space<any>>) dst(%85 : memref<1x128xf32, #tpu.memory_space<vmem>>)
    %c6_i32_60 = arith.constant 6 : i32
    %c0_i32_61 = arith.constant 0 : i32
    %88 = tpu.memref_slice %arg2[%45, %c0_i32_61] : memref<40x128xf32, #tpu.memory_space<any>> -> memref<1x128xf32, #tpu.memory_space<any>>
    %c6_i32_62 = arith.constant 6 : i32
    %c0_i32_63 = arith.constant 0 : i32
    %89 = tpu.memref_slice %arg5[%c6_i32_62, %c0_i32_63] : memref<9x128xf32, #tpu.memory_space<vmem>> -> memref<1x128xf32, #tpu.memory_space<vmem>>
    %90 = tpu.memref_slice %arg6[%c6_i32_60] : memref<9x!tpu.dma_semaphore, #tpu.memory_space<semaphore_mem>> -> memref<1x!tpu.dma_semaphore, #tpu.memory_space<semaphore_mem>>
    %91 = tpu.memref_squeeze %90 : memref<1x!tpu.dma_semaphore, #tpu.memory_space<semaphore_mem>> -> memref<!tpu.dma_semaphore, #tpu.memory_space<semaphore_mem>>
    tpu.wait_dma2 semaphore(%91 : memref<!tpu.dma_semaphore, #tpu.memory_space<semaphore_mem>>) src(%88 : memref<1x128xf32, #tpu.memory_space<any>>) dst(%89 : memref<1x128xf32, #tpu.memory_space<vmem>>)
    %c7_i32_64 = arith.constant 7 : i32
    %c0_i32_65 = arith.constant 0 : i32
    %92 = tpu.memref_slice %arg2[%52, %c0_i32_65] : memref<40x128xf32, #tpu.memory_space<any>> -> memref<1x128xf32, #tpu.memory_space<any>>
    %c7_i32_66 = arith.constant 7 : i32
    %c0_i32_67 = arith.constant 0 : i32
    %93 = tpu.memref_slice %arg5[%c7_i32_66, %c0_i32_67] : memref<9x128xf32, #tpu.memory_space<vmem>> -> memref<1x128xf32, #tpu.memory_space<vmem>>
    %94 = tpu.memref_slice %arg6[%c7_i32_64] : memref<9x!tpu.dma_semaphore, #tpu.memory_space<semaphore_mem>> -> memref<1x!tpu.dma_semaphore, #tpu.memory_space<semaphore_mem>>
    %95 = tpu.memref_squeeze %94 : memref<1x!tpu.dma_semaphore, #tpu.memory_space<semaphore_mem>> -> memref<!tpu.dma_semaphore, #tpu.memory_space<semaphore_mem>>
    tpu.wait_dma2 semaphore(%95 : memref<!tpu.dma_semaphore, #tpu.memory_space<semaphore_mem>>) src(%92 : memref<1x128xf32, #tpu.memory_space<any>>) dst(%93 : memref<1x128xf32, #tpu.memory_space<vmem>>)
    %c8_i32_68 = arith.constant 8 : i32
    %c0_i32_69 = arith.constant 0 : i32
    %96 = tpu.memref_slice %arg2[%59, %c0_i32_69] : memref<40x128xf32, #tpu.memory_space<any>> -> memref<1x128xf32, #tpu.memory_space<any>>
    %c8_i32_70 = arith.constant 8 : i32
    %c0_i32_71 = arith.constant 0 : i32
    %97 = tpu.memref_slice %arg5[%c8_i32_70, %c0_i32_71] : memref<9x128xf32, #tpu.memory_space<vmem>> -> memref<1x128xf32, #tpu.memory_space<vmem>>
    %98 = tpu.memref_slice %arg6[%c8_i32_68] : memref<9x!tpu.dma_semaphore, #tpu.memory_space<semaphore_mem>> -> memref<1x!tpu.dma_semaphore, #tpu.memory_space<semaphore_mem>>
    %99 = tpu.memref_squeeze %98 : memref<1x!tpu.dma_semaphore, #tpu.memory_space<semaphore_mem>> -> memref<!tpu.dma_semaphore, #tpu.memory_space<semaphore_mem>>
    tpu.wait_dma2 semaphore(%99 : memref<!tpu.dma_semaphore, #tpu.memory_space<semaphore_mem>>) src(%96 : memref<1x128xf32, #tpu.memory_space<any>>) dst(%97 : memref<1x128xf32, #tpu.memory_space<vmem>>)
    %c0 = arith.constant 0 : index
    %c0_72 = arith.constant 0 : index
    %100 = vector.load %arg5[%c0, %c0_72] : memref<9x128xf32, #tpu.memory_space<vmem>>, vector<9x128xf32>
    %cst = arith.constant 11.3137083 : f32
    %101 = vector.broadcast %cst : f32 to vector<9x128xf32>
    %102 = arith.mulf %100, %101 : vector<9x128xf32>
    %c0_73 = arith.constant 0 : index
    %c0_74 = arith.constant 0 : index
    %103 = vector.load %arg3[%c0_73, %c0_74] : memref<9x128xf32, #tpu.memory_space<vmem>>, vector<9x128xf32>
    %104 = arith.addf %102, %103 : vector<9x128xf32>
    %c0_75 = arith.constant 0 : index
    %c0_76 = arith.constant 0 : index
    %c0_77 = arith.constant 0 : index
    %105 = vector.load %arg4[%c0_75, %c0_76, %c0_77] : memref<1x9x128xf32, #tpu.memory_space<vmem>>, vector<1x9x128xf32>
    %106 = vector.shape_cast %105 : vector<1x9x128xf32> to vector<9x128xf32>
    %107 = vector.shape_cast %104 : vector<9x128xf32> to vector<1x9x128xf32>
    tpu.vector_store %arg4[%c0_75, %c0_76, %c0_77], %107 {strides = array<i32>} : memref<1x9x128xf32, #tpu.memory_space<vmem>>, vector<1x9x128xf32>,
    return
  }
  func.func @transform_1(%arg0: i32, %arg1: memref<18xi32, #tpu.memory_space<smem>>) -> (i32, i32) {
    %c0_i32 = arith.constant 0 : i32
    %c0_i32_0 = arith.constant 0 : i32
    %c0_i32_1 = arith.constant 0 : i32
    return %c0_i32, %c0_i32_0 : i32, i32
  }
  func.func @transform_2(%arg0: i32, %arg1: memref<18xi32, #tpu.memory_space<smem>>) -> (i32, i32, i32) {
    %c0_i32 = arith.constant 0 : i32
    %c0_i32_0 = arith.constant 0 : i32
    %c0_i32_1 = arith.constant 0 : i32
    return %arg0, %c0_i32, %c0_i32_0 : i32, i32, i32
  }
}

</mosaic_0001>

<llo_original>
// kernel: tpu_custom_call.1
$region0: #{tpu_custom_call.1}
  #allocation0 [shape = 'u32[]', space=smem, size = 0x4, offset = 0x4, fixed_abs, tag = 'smem constant byte address 0x4 - core index']
  #allocation1 [shape = 'u32[144,128]{1,0:T(1,128)}', space=vmem, size = 0x12000, scoped, tag = 'internal scratch']
  #allocation2 [shape = 'f32[9,128]{1,0:T(8,128)}', space=vmem, size = 0x2000, scoped, tag = 'scratch operand']
  #allocation3 [shape = 's32[9]{0}', space=sflag, size = 0x24, scoped, tag = 'scratch operand']
  #allocation4 [shape = 's32[1]{0}', space=sflag, size = 0x4, scoped, tag = 'scoped memory for tpu_custom_call.1']
  #allocation5 [shape = 'u8[512]{0}', space=smem, size = 0x200, scoped, tag = 'prefetched SMEM operand 0']
  #allocation8 [shape = 's32[]', space=sflag, size = 0x4, offset = 0, fixed_abs, tag = 'sflag constant byte address 0x0 - dummy sync flag']
  #allocation9 [shape = 's32[]', space=sflag, size = 0x4, offset = 0, fixed_abs, tag = 'sflag constant byte address 0x0 - dummy sync flag']
  #allocation10 [shape = 'u32[]', space=smem, size = 0x4, offset = 0x44, fixed_abs, tag = 'smem constant byte address 0x44 - assertion arg 0']
  #allocation11 [shape = 'u32[]', space=smem, size = 0x4, offset = 0x48, fixed_abs, tag = 'smem constant byte address 0x48 - assertion arg 1']
  #allocation12 [shape = 's32[]', space=sflag, size = 0x4, offset = 0, fixed_abs, tag = 'sflag constant byte address 0x0 - dummy sync flag']
  #allocation13 [shape = 's32[]', space=sflag, size = 0x4, offset = 0, fixed_abs, tag = 'sflag constant byte address 0x0 - dummy sync flag']
  #allocation14 [shape = 's32[]', space=sflag, size = 0x4, offset = 0, fixed_abs, tag = 'sflag constant byte address 0x0 - dummy sync flag']
  #allocation15 [shape = 's32[]', space=sflag, size = 0x4, offset = 0, fixed_abs, tag = 'sflag constant byte address 0x0 - dummy sync flag']
  #allocation16 [shape = 's32[]', space=sflag, size = 0x4, offset = 0, fixed_abs, tag = 'sflag constant byte address 0x0 - dummy sync flag']
  #allocation17 [shape = 's32[]', space=sflag, size = 0x4, offset = 0, fixed_abs, tag = 'sflag constant byte address 0x0 - dummy sync flag']
  #allocation18 [shape = 's32[]', space=sflag, size = 0x4, offset = 0, fixed_abs, tag = 'sflag constant byte address 0x0 - dummy sync flag']
  #allocation19 [shape = 's32[]', space=sflag, size = 0x4, offset = 0, fixed_abs, tag = 'sflag constant byte address 0x0 - dummy sync flag']
  #allocation20 [shape = 's32[]', space=sflag, size = 0x4, offset = 0, fixed_abs, tag = 'sflag constant byte address 0x0 - dummy sync flag']
  #allocation21 [shape = 's32[]', space=sflag, size = 0x4, offset = 0, fixed_abs, tag = 'sflag constant byte address 0x0 - dummy sync flag']
  #allocation22 [shape = 's32[]', space=sflag, size = 0x4, offset = 0, fixed_abs, tag = 'sflag constant byte address 0x0 - dummy sync flag']
  #allocation23 [shape = 's32[]', space=sflag, size = 0x4, offset = 0, fixed_abs, tag = 'sflag constant byte address 0x0 - dummy sync flag']
  #allocation24 [shape = 's32[]', space=sflag, size = 0x4, offset = 0, fixed_abs, tag = 'sflag constant byte address 0x0 - dummy sync flag']
  #allocation25 [shape = 's32[]', space=sflag, size = 0x4, offset = 0, fixed_abs, tag = 'sflag constant byte address 0x0 - dummy sync flag']
  #allocation26 [shape = 's32[]', space=sflag, size = 0x4, offset = 0, fixed_abs, tag = 'sflag constant byte address 0x0 - dummy sync flag']
  #allocation27 [shape = 's32[]', space=sflag, size = 0x4, offset = 0, fixed_abs, tag = 'sflag constant byte address 0x0 - dummy sync flag']
  %s0 = inlined_call_operand.hbm [shape: s32[18], index: 0, kind: input, shape index: {}]
  %s1 = inlined_call_operand.hbm [shape: f32[40,128], index: 1, kind: input, shape index: {}]
  %s2 = inlined_call_operand.hbm [shape: f32[9,128], index: 2, kind: input, shape index: {}]
  %s3 = inlined_call_operand.vmem [shape: f32[2,9,128], index: 3, kind: output, shape index: {}]
  %s4 = sld [smem:[#allocation0]]
  $region77: #{tpu_custom_call.1} parent=0
    _
  %s6 = ssub.s32 1, %s4
  %s7 = scalar_select 0, %s6, %s4
  %9 = dma.hbm_to_smem %s0, 16, [#allocation5], [#allocation4]
  %10 = dma.done [#allocation4], 16
  %11 = sfence
  $region1: #{tpu_custom_call.1} parent=0
    #allocation6 [shape = 'u8[8192]{0}', space=vmem, size = 0x2000, scoped, tag = 'input window, operand 2, single buffered']
    #allocation7 [shape = 's32[2]{0}', space=sflag, size = 0x8, scoped, tag = 'scoped memory for tpu_custom_call.1']
    %12 = vsyncpa [#allocation7], 0
    loop: start=0, step=1, limit=4
    $region2: #{tpu_custom_call.1} parent=1 // loop_pre_header
      _
    $region3: #{tpu_custom_call.1} parent=1 // loop_header
      %s14 = sphi 0, %s18
      %p15 = scmp.ge.s32.totalorder %s14, 4
      %s22 = sphi 0, %s22
      %s24 = sphi 0, %s22
      %s25 = sphi 0, %s24
      %s39 = sphi 0, %s25
      %s45 = sphi 0, %s47
      %s48 = sphi 0, %s45
      %s49 = sphi 0, %s48
      %s65 = sphi 0, %s49
    $region4: #{tpu_custom_call.1} parent=1 // loop_header_branch
      %17 = sbr.rel (%p15) target = $region8
    $region5: #{tpu_custom_call.1} parent=1 // loop_body
      %s19 = ssub.s32 %s14, 1
      %s20 = ssub.s32 %s14, 2
      %s21 = sadd.s32 %s14, 1
      %s23 = sadd.s32 %s22, 1
      %p26 = scmp.eq.s32.totalorder %s14, 1
      %p27 = scmp.ne.s32.totalorder %s22, %s24
      %p28 = scmp.eq.s32.totalorder %s14, 0
      %p29 = por %p27, %p28
      %p30 = scmp.ne.s32.totalorder %s22, %s24
      %p31 = scmp.eq.s32.totalorder %s19, 1
      %p32 = por %p30, %p31
      %p33 = scmp.ne.s32.totalorder %s24, %s25
      %p34 = scmp.eq.s32.totalorder %s19, 0
      %p35 = por %p33, %p34
      %p36 = scmp.ne.s32.totalorder %s24, %s25
      %p37 = scmp.eq.s32.totalorder %s20, 1
      %p38 = por %p36, %p37
      %p40 = scmp.ne.s32.totalorder %s25, %s39
      %p41 = scmp.eq.s32.totalorder %s20, 0
      %p42 = por %p40, %p41
      %s43 = ssub.s32 %s14, %s21
      %p44 = scmp.eq.s32.totalorder %s43, 0
      %s46 = sadd.s32 %s45, 1
      %s47 = scalar_select %p44, %s45, %s46
      %p50 = pneg %p44
      %p51 = scmp.eq.s32.totalorder %s14, 1
      %p52 = por %p50, %p51
      %p53 = scmp.ne.s32.totalorder %s45, %s48
      %p54 = scmp.eq.s32.totalorder %s14, 0
      %p55 = por %p53, %p54
      %p56 = scmp.ne.s32.totalorder %s45, %s48
      %p57 = scmp.eq.s32.totalorder %s19, 1
      %p58 = por %p56, %p57
      %p59 = scmp.ne.s32.totalorder %s48, %s49
      %p60 = scmp.eq.s32.totalorder %s19, 0
      %p61 = por %p59, %p60
      %p62 = scmp.ne.s32.totalorder %s48, %s49
      %p63 = scmp.eq.s32.totalorder %s20, 1
      %p64 = por %p62, %p63
      %p66 = scmp.ne.s32.totalorder %s49, %s65
      %p67 = scmp.eq.s32.totalorder %s20, 0
      %p68 = por %p66, %p67
      %p69 = scmp.le.s32.totalorder 1, %s14
      %p70 = scmp.lt.s32.totalorder %s14, 3
      %p71 = pnand %p69, %p70
      %p72 = pneg %p71
      // Predicated region
      $region9: #{tpu_custom_call.1} parent=5 // pred_check
        _
      $region10: #{tpu_custom_call.1} parent=5 // pred_check_branch
        %74 = sbr.rel (%p71) target = $region12
      $region11: #{tpu_custom_call.1} parent=5 // pred_region
        %s75 = ssub.s32 %s14, 1
        // Predicated region
        $region13: #{tpu_custom_call.1} parent=11 // pred_check
          %p76 = pneg %p35
        $region14: #{tpu_custom_call.1} parent=11 // pred_check_branch
          %78 = sbr.rel (%p76) target = $region16
        $region15: #{tpu_custom_call.1} parent=11 // pred_region
          %s80 = ssub.s32 256, 256
          %81 = vsyncadd [#allocation7], %s80
          %s82 = sshll.u32 [#allocation6], 4
          %s83 = int_to_ptr.vmem [resolvable:$true] %s82
          %88 = dma.hbm_to_vmem [thread:$0]  %s2, 256, %s83, [#allocation7], 128, 128, 8
        $region16: #{tpu_custom_call.1} parent=11 // pred_fallthru
          _
      $region12: #{tpu_custom_call.1} parent=5 // pred_fallthru
        _
      %p89 = scmp.lt.s32.totalorder %s14, 2
      // Predicated region
      $region17: #{tpu_custom_call.1} parent=5 // pred_check
        %p90 = pneg %p89
      $region18: #{tpu_custom_call.1} parent=5 // pred_check_branch
        %92 = sbr.rel (%p90) target = $region20
      $region19: #{tpu_custom_call.1} parent=5 // pred_region
        _
      $region20: #{tpu_custom_call.1} parent=5 // pred_fallthru
        _
      %p93 = scmp.le.s32.totalorder 1, %s14
      %p94 = scmp.lt.s32.totalorder %s14, 3
      %p95 = pnand %p93, %p94
      %p96 = pneg %p95
      // Predicated region
      $region21: #{tpu_custom_call.1} parent=5 // pred_check
        _
      $region22: #{tpu_custom_call.1} parent=5 // pred_check_branch
        %98 = sbr.rel (%p95) target = $region24
      $region23: #{tpu_custom_call.1} parent=5 // pred_region
        %s99 = ssub.s32 %s14, 1
        // Predicated region
        $region25: #{tpu_custom_call.1} parent=23 // pred_check
          %p100 = pneg %p35
        $region26: #{tpu_custom_call.1} parent=23 // pred_check_branch
          %102 = sbr.rel (%p100) target = $region28
        $region27: #{tpu_custom_call.1} parent=23 // pred_region
          %103 = dma.done [#allocation7], 256
        $region28: #{tpu_custom_call.1} parent=23 // pred_fallthru
          _
        %p104 = pneg %p35
        %p105 = pneg %p32
        %p106 = pneg %p61
        %p107 = pneg %p58
        %p108 = scmp.lt.s32.totalorder %s19, 1
        %s109 = scalar_select %p108, %s19, 1
        %s110 = smul.addr %s109, 2
        %s111 = smul.addr %s110, 8
        %s112 = scalar_lea.vmem %s3, %s111
        %p113 = scmp.lt.s32.totalorder %s19, 1
        %s114 = scalar_select %p113, %s19, 1
        %s115 = smul.addr %s114, 2
        %s116 = smul.addr %s115, 8
        %s117 = scalar_lea.vmem %s3, %s116
        %s118 = smul.u32 %s19, 9
        %s119 = sld [smem:[#allocation5 + %s118]]
        %s120 = smul.addr %s119, 16
        %s121 = scalar_lea.hbm %s1, %s120
        // Predicated region
        $region29: #{tpu_custom_call.1} parent=23 // pred_check
          _
        $region30: #{tpu_custom_call.1} parent=23 // pred_check_branch
          %123 = sbr.rel target = $region32
        $region31: #{tpu_custom_call.1} parent=23 // pred_region
          %124 = sst [smem:[#allocation10]] [#allocation9]
          %125 = sst [smem:[#allocation11]] [#allocation8]
        $region32: #{tpu_custom_call.1} parent=23 // pred_fallthru
          _
        %127 = shalt.err (0)
        %s129 = sshll.u32 [#allocation2], 4
        %s130 = int_to_ptr.vmem [resolvable:$true] %s129
        %132 = dma.hbm_to_vmem [thread:$0]  %s121, 16, %s130, [#allocation3]
        %s133 = sadd.s32 %s118, 1
        %s134 = sld [smem:[#allocation5 + %s133]]
        %s135 = smul.addr %s134, 16
        %s136 = scalar_lea.hbm %s1, %s135
        %s137 = scalar_lea.vmem [#allocation2], 1
        %s138 = scalar_lea.sflag [#allocation3], 1
        // Predicated region
        $region33: #{tpu_custom_call.1} parent=23 // pred_check
          _
        $region34: #{tpu_custom_call.1} parent=23 // pred_check_branch
          %140 = sbr.rel target = $region36
        $region35: #{tpu_custom_call.1} parent=23 // pred_region
          %141 = sst [smem:[#allocation10]] [#allocation13]
          %142 = sst [smem:[#allocation11]] [#allocation12]
        $region36: #{tpu_custom_call.1} parent=23 // pred_fallthru
          _
        %144 = shalt.err (0)
        %s146 = sshll.u32 %s137, 4
        %s147 = int_to_ptr.vmem [resolvable:$true] %s146
        %149 = dma.hbm_to_vmem [thread:$0]  %s136, 16, %s147, %s138
        %s150 = sadd.s32 %s118, 2
        %s151 = sld [smem:[#allocation5 + %s150]]
        %s152 = smul.addr %s151, 16
        %s153 = scalar_lea.hbm %s1, %s152
        %s154 = scalar_lea.vmem [#allocation2], 2
        %s155 = scalar_lea.sflag [#allocation3], 2
        // Predicated region
        $region37: #{tpu_custom_call.1} parent=23 // pred_check
          _
        $region38: #{tpu_custom_call.1} parent=23 // pred_check_branch
          %157 = sbr.rel target = $region40
        $region39: #{tpu_custom_call.1} parent=23 // pred_region
          %158 = sst [smem:[#allocation10]] [#allocation15]
          %159 = sst [smem:[#allocation11]] [#allocation14]
        $region40: #{tpu_custom_call.1} parent=23 // pred_fallthru
          _
        %161 = shalt.err (0)
        %s163 = sshll.u32 %s154, 4
        %s164 = int_to_ptr.vmem [resolvable:$true] %s163
        %166 = dma.hbm_to_vmem [thread:$0]  %s153, 16, %s164, %s155
        %s167 = sadd.s32 %s118, 3
        %s168 = sld [smem:[#allocation5 + %s167]]
        %s169 = smul.addr %s168, 16
        %s170 = scalar_lea.hbm %s1, %s169
        %s171 = scalar_lea.vmem [#allocation2], 3
        %s172 = scalar_lea.sflag [#allocation3], 3
        // Predicated region
        $region41: #{tpu_custom_call.1} parent=23 // pred_check
          _
        $region42: #{tpu_custom_call.1} parent=23 // pred_check_branch
          %174 = sbr.rel target = $region44
        $region43: #{tpu_custom_call.1} parent=23 // pred_region
          %175 = sst [smem:[#allocation10]] [#allocation17]
          %176 = sst [smem:[#allocation11]] [#allocation16]
        $region44: #{tpu_custom_call.1} parent=23 // pred_fallthru
          _
        %178 = shalt.err (0)
        %s180 = sshll.u32 %s171, 4
        %s181 = int_to_ptr.vmem [resolvable:$true] %s180
        %183 = dma.hbm_to_vmem [thread:$0]  %s170, 16, %s181, %s172
        %s184 = sadd.s32 %s118, 4
        %s185 = sld [smem:[#allocation5 + %s184]]
        %s186 = smul.addr %s185, 16
        %s187 = scalar_lea.hbm %s1, %s186
        %s188 = scalar_lea.vmem [#allocation2], 4
        %s189 = scalar_lea.sflag [#allocation3], 4
        // Predicated region
        $region45: #{tpu_custom_call.1} parent=23 // pred_check
          _
        $region46: #{tpu_custom_call.1} parent=23 // pred_check_branch
          %191 = sbr.rel target = $region48
        $region47: #{tpu_custom_call.1} parent=23 // pred_region
          %192 = sst [smem:[#allocation10]] [#allocation19]
          %193 = sst [smem:[#allocation11]] [#allocation18]
        $region48: #{tpu_custom_call.1} parent=23 // pred_fallthru
          _
        %195 = shalt.err (0)
        %s197 = sshll.u32 %s188, 4
        %s198 = int_to_ptr.vmem [resolvable:$true] %s197
        %200 = dma.hbm_to_vmem [thread:$0]  %s187, 16, %s198, %s189
        %s201 = sadd.s32 %s118, 5
        %s202 = sld [smem:[#allocation5 + %s201]]
        %s203 = smul.addr %s202, 16
        %s204 = scalar_lea.hbm %s1, %s203
        %s205 = scalar_lea.vmem [#allocation2], 5
        %s206 = scalar_lea.sflag [#allocation3], 5
        // Predicated region
        $region49: #{tpu_custom_call.1} parent=23 // pred_check
          _
        $region50: #{tpu_custom_call.1} parent=23 // pred_check_branch
          %208 = sbr.rel target = $region52
        $region51: #{tpu_custom_call.1} parent=23 // pred_region
          %209 = sst [smem:[#allocation10]] [#allocation21]
          %210 = sst [smem:[#allocation11]] [#allocation20]
        $region52: #{tpu_custom_call.1} parent=23 // pred_fallthru
          _
        %212 = shalt.err (0)
        %s214 = sshll.u32 %s205, 4
        %s215 = int_to_ptr.vmem [resolvable:$true] %s214
        %217 = dma.hbm_to_vmem [thread:$0]  %s204, 16, %s215, %s206
        %s218 = sadd.s32 %s118, 6
        %s219 = sld [smem:[#allocation5 + %s218]]
        %s220 = smul.addr %s219, 16
        %s221 = scalar_lea.hbm %s1, %s220
        %s222 = scalar_lea.vmem [#allocation2], 6
        %s223 = scalar_lea.sflag [#allocation3], 6
        // Predicated region
        $region53: #{tpu_custom_call.1} parent=23 // pred_check
          _
        $region54: #{tpu_custom_call.1} parent=23 // pred_check_branch
          %225 = sbr.rel target = $region56
        $region55: #{tpu_custom_call.1} parent=23 // pred_region
          %226 = sst [smem:[#allocation10]] [#allocation23]
          %227 = sst [smem:[#allocation11]] [#allocation22]
        $region56: #{tpu_custom_call.1} parent=23 // pred_fallthru
          _
        %229 = shalt.err (0)
        %s231 = sshll.u32 %s222, 4
        %s232 = int_to_ptr.vmem [resolvable:$true] %s231
        %234 = dma.hbm_to_vmem [thread:$0]  %s221, 16, %s232, %s223
        %s235 = sadd.s32 %s118, 7
        %s236 = sld [smem:[#allocation5 + %s235]]
        %s237 = smul.addr %s236, 16
        %s238 = scalar_lea.hbm %s1, %s237
        %s239 = scalar_lea.vmem [#allocation2], 7
        %s240 = scalar_lea.sflag [#allocation3], 7
        // Predicated region
        $region57: #{tpu_custom_call.1} parent=23 // pred_check
          _
        $region58: #{tpu_custom_call.1} parent=23 // pred_check_branch
          %242 = sbr.rel target = $region60
        $region59: #{tpu_custom_call.1} parent=23 // pred_region
          %243 = sst [smem:[#allocation10]] [#allocation25]
          %244 = sst [smem:[#allocation11]] [#allocation24]
        $region60: #{tpu_custom_call.1} parent=23 // pred_fallthru
          _
        %246 = shalt.err (0)
        %s248 = sshll.u32 %s239, 4
        %s249 = int_to_ptr.vmem [resolvable:$true] %s248
        %251 = dma.hbm_to_vmem [thread:$0]  %s238, 16, %s249, %s240
        %s252 = sadd.s32 %s118, 8
        %s253 = sld [smem:[#allocation5 + %s252]]
        %s254 = smul.addr %s253, 16
        %s255 = scalar_lea.hbm %s1, %s254
        %s256 = scalar_lea.vmem [#allocation2], 8
        %s257 = scalar_lea.sflag [#allocation3], 8
        // Predicated region
        $region61: #{tpu_custom_call.1} parent=23 // pred_check
          _
        $region62: #{tpu_custom_call.1} parent=23 // pred_check_branch
          %259 = sbr.rel target = $region64
        $region63: #{tpu_custom_call.1} parent=23 // pred_region
          %260 = sst [smem:[#allocation10]] [#allocation27]
          %261 = sst [smem:[#allocation11]] [#allocation26]
        $region64: #{tpu_custom_call.1} parent=23 // pred_fallthru
          _
        %263 = shalt.err (0)
        %s265 = sshll.u32 %s256, 4
        %s266 = int_to_ptr.vmem [resolvable:$true] %s265
        %268 = dma.hbm_to_vmem [thread:$0]  %s255, 16, %s266, %s257
        %s269 = smul.u32 1, 1
        %s270 = sshll.u32 %s269, 4
        %271 = dma.done [#allocation3], %s270
        %s272 = sshll.u32 %s269, 4
        %273 = dma.done %s138, %s272
        %s274 = sshll.u32 %s269, 4
        %275 = dma.done %s155, %s274
        %s276 = sshll.u32 %s269, 4
        %277 = dma.done %s172, %s276
        %s278 = sshll.u32 %s269, 4
        %279 = dma.done %s189, %s278
        %s280 = sshll.u32 %s269, 4
        %281 = dma.done %s206, %s280
        %s282 = sshll.u32 %s269, 4
        %283 = dma.done %s223, %s282
        %s284 = sshll.u32 %s269, 4
        %285 = dma.done %s240, %s284
        %s286 = sshll.u32 %s269, 4
        %287 = dma.done %s257, %s286
        %v288 = vld [vmem:[#allocation2] sm:$0xff]
        %v289 = vld [vmem:[#allocation2 + $0x8] sm:$0x1]
        %v290 = vmul.f32 %v288, 11.313708
        %v291 = vmul.f32 %v289, 11.313708
        %v292 = vld [vmem:[#allocation6] sm:$0xff]
        %v293 = vld [vmem:[#allocation6 + $0x8] sm:$0x1]
        %v294 = vadd.f32 %v290, %v292
        %v295 = vadd.f32 %v291, %v293
        %296 = vst [vmem:[%s117] sm:$0xff] %v294
        %297 = vst [vmem:[%s117 + $0x8] sm:$0x1] %v295
        %p298 = scmp.lt.s32.totalorder %s19, 1
        %s299 = scalar_select %p298, %s19, 1
        %s300 = smul.addr %s299, 2
        %s301 = smul.addr %s300, 8
        %s302 = scalar_lea.vmem %s3, %s301
        // Predicated region
        $region65: #{tpu_custom_call.1} parent=23 // pred_check
          %p303 = pneg %p58
        $region66: #{tpu_custom_call.1} parent=23 // pred_check_branch
          %305 = sbr.rel (%p303) target = $region68
        $region67: #{tpu_custom_call.1} parent=23 // pred_region
          _
        $region68: #{tpu_custom_call.1} parent=23 // pred_fallthru
          _
      $region24: #{tpu_custom_call.1} parent=5 // pred_fallthru
        _
      %p306 = scmp.le.s32.totalorder 2, %s14
      // Predicated region
      $region69: #{tpu_custom_call.1} parent=5 // pred_check
        %p307 = pneg %p306
      $region70: #{tpu_custom_call.1} parent=5 // pred_check_branch
        %309 = sbr.rel (%p307) target = $region72
      $region71: #{tpu_custom_call.1} parent=5 // pred_region
        %s310 = ssub.s32 %s14, 2
        // Predicated region
        $region73: #{tpu_custom_call.1} parent=71 // pred_check
          %p311 = pneg %p64
        $region74: #{tpu_custom_call.1} parent=71 // pred_check_branch
          %313 = sbr.rel (%p311) target = $region76
        $region75: #{tpu_custom_call.1} parent=71 // pred_region
          %p314 = scmp.lt.s32.totalorder %s20, 1
          %s315 = scalar_select %p314, %s20, 1
          %s316 = smul.addr %s315, 2
          %s317 = smul.addr %s316, 8
          %s318 = scalar_lea.vmem %s3, %s317
        $region76: #{tpu_custom_call.1} parent=71 // pred_fallthru
          _
      $region72: #{tpu_custom_call.1} parent=5 // pred_fallthru
        _
    $region6: #{tpu_custom_call.1} parent=1 // loop_footer
      %s18 = sadd.s32 1, %s14
    $region7: #{tpu_custom_call.1} parent=1 // loop_footer_branch
      %13 = sbr.rel target = $region3
    $region8: #{tpu_custom_call.1} parent=1 // loop_exit
      _
    %319 = vsyncpa [#allocation7], 1
    %s320 = scalar_lea.sflag [#allocation7], 1
    %321 = vsyncpa %s320, 1
  %322 = vsyncmov [#allocation3]
  %s323 = vpop.sfrf %322
  %p324 = scmp.eq.s32.totalorder %s323, 0
  %p325 = pneg %p324
  %327 = shalt.err (%p325)
  %s328 = scalar_lea.sflag [#allocation3], 1
  %329 = vsyncmov %s328
  %s330 = vpop.sfrf %329
  %p331 = scmp.eq.s32.totalorder %s330, 0
  %p332 = pneg %p331
  %334 = shalt.err (%p332)
  %s335 = scalar_lea.sflag [#allocation3], 2
  %336 = vsyncmov %s335
  %s337 = vpop.sfrf %336
  %p338 = scmp.eq.s32.totalorder %s337, 0
  %p339 = pneg %p338
  %341 = shalt.err (%p339)
  %s342 = scalar_lea.sflag [#allocation3], 3
  %343 = vsyncmov %s342
  %s344 = vpop.sfrf %343
  %p345 = scmp.eq.s32.totalorder %s344, 0
  %p346 = pneg %p345
  %348 = shalt.err (%p346)
  %s349 = scalar_lea.sflag [#allocation3], 4
  %350 = vsyncmov %s349
  %s351 = vpop.sfrf %350
  %p352 = scmp.eq.s32.totalorder %s351, 0
  %p353 = pneg %p352
  %355 = shalt.err (%p353)
  %s356 = scalar_lea.sflag [#allocation3], 5
  %357 = vsyncmov %s356
  %s358 = vpop.sfrf %357
  %p359 = scmp.eq.s32.totalorder %s358, 0
  %p360 = pneg %p359
  %362 = shalt.err (%p360)
  %s363 = scalar_lea.sflag [#allocation3], 6
  %364 = vsyncmov %s363
  %s365 = vpop.sfrf %364
  %p366 = scmp.eq.s32.totalorder %s365, 0
  %p367 = pneg %p366
  %369 = shalt.err (%p367)
  %s370 = scalar_lea.sflag [#allocation3], 7
  %371 = vsyncmov %s370
  %s372 = vpop.sfrf %371
  %p373 = scmp.eq.s32.totalorder %s372, 0
  %p374 = pneg %p373
  %376 = shalt.err (%p374)
  %s377 = scalar_lea.sflag [#allocation3], 8
  %378 = vsyncmov %s377
  %s379 = vpop.sfrf %378
  %p380 = scmp.eq.s32.totalorder %s379, 0
  %p381 = pneg %p380
  %383 = shalt.err (%p381)

</llo_original>
